<compile_context>
chip_gen: v6e
topology: v6e:2x2x1
jax: 0.10.0
libtpu: 0.0.40
codegen_flags: <defaults>
</compile_context>

<pallas_src>
import jax
import jax.numpy as jnp
from jax import lax
from jax.experimental import pallas as pl
from jax.experimental.pallas import tpu as pltpu


# ----------------------------------------------------------------------------
# Tile-size selection: TN must be a multiple of 128 or equal to N. Capped at
# 256 so double-buffered tiles + (S, TN) temporaries fit v7x's 64 MiB VMEM.
# ----------------------------------------------------------------------------
def _choose_tile_n(n):
    for tn in (256, 128):
        if n % tn == 0:
            return tn
    return n  # small / ragged N: one tile covers the whole axis


# ----------------------------------------------------------------------------
# Fused kernel factory (interp -> split first conv -> remaining MLP layers).
# ----------------------------------------------------------------------------
def _make_fused_kernel(num_layers, has_points1, use_knn):
    n_w = num_layers + (1 if has_points1 else 0)   # first-layer weight is split

    def kernel(*refs):
        idx = 0
        if use_knn:
            xyz1_ref = refs[idx]; idx += 1         # (1, 3, TN)  channels-first
            xyz2_ref = refs[idx]; idx += 1         # (1, S, 3)   channels-last
        if has_points1:
            pts1_ref = refs[idx]; idx += 1         # (1, D1, TN)
        pts2_ref = refs[idx]; idx += 1             # (1, D2, S) or (1, D2, 1)
        w_refs = refs[idx:idx + n_w]; idx += n_w   # (Cout, Cin) bf16
        b_refs = refs[idx:idx + num_layers]; idx += num_layers   # (Cout, 1) f32
        out_ref = refs[idx]                        # (1, Cout_last, TN)

        tn = out_ref.shape[2]
        p2 = pts2_ref[0].astype(jnp.float32)       # (D2, S)

        if use_knn:
            x1 = xyz1_ref[0].astype(jnp.float32)   # (C, TN)
            x2 = xyz2_ref[0].astype(jnp.float32)   # (S, C)
            s = x2.shape[0]

            # d[s, n] = -2*x1.x2 + |x1|^2 + |x2|^2 (torch formula), exact f32
            # elementwise (C == 3, no MXU needed). Lane axis = TN (lane-dense).
            ab = jnp.zeros((s, tn), jnp.float32)
            a2 = jnp.zeros((1, tn), jnp.float32)
            b2 = jnp.zeros((s, 1), jnp.float32)
            for c in range(x1.shape[0]):
                x1c = x1[c:c + 1, :]               # (1, TN)
                x2c = x2[:, c:c + 1]               # (S, 1)
                ab = ab + x2c * x1c
                a2 = a2 + x1c * x1c
                b2 = b2 + x2c * x2c
            d = -2.0 * ab + a2 + b2                # (S, TN)

            # 3 nearest neighbours per query -> sparse (S, TN) weight matrix
            # (interpolation then becomes a single MXU matmul, no gather).
            row = lax.broadcasted_iota(jnp.int32, (s, tn), 0)
            w = jnp.zeros((s, tn), jnp.float32)
            wsum = jnp.zeros((1, tn), jnp.float32)
            for _ in range(3):
                dmin = jnp.min(d, axis=0, keepdims=True)                  # (1, TN)
                first = jnp.min(jnp.where(d == dmin, row, s),
                                axis=0, keepdims=True)                    # tie-break
                onehot = row == first
                recip = 1.0 / (dmin + 1e-8)
                w = w + jnp.where(onehot, recip, 0.0)
                wsum = wsum + recip
                d = jnp.where(onehot, jnp.inf, d)

            wn = (w * pl.reciprocal(wsum, approx=True)).astype(jnp.bfloat16)
            interp = jnp.dot(p2.astype(jnp.bfloat16), wn,
                             preferred_element_type=jnp.float32)          # (D2, TN)
        else:
            # S == 1: every query point copies the single reference feature.
            interp = jnp.broadcast_to(p2, (p2.shape[0], tn))              # (D2, TN)

        # MLP stack, channels-first: 1x1 conv == (Cout, Cin) @ (Cin, TN).
        interp_bf = interp.astype(jnp.bfloat16)
        if has_points1:
            p1 = pts1_ref[0].astype(jnp.bfloat16)                         # (D1, TN)
            y = (jnp.dot(w_refs[0][...], p1, preferred_element_type=jnp.float32)
                 + jnp.dot(w_refs[1][...], interp_bf,
                           preferred_element_type=jnp.float32))
            rest = w_refs[2:]
        else:
            y = jnp.dot(w_refs[0][...], interp_bf,
                        preferred_element_type=jnp.float32)
            rest = w_refs[1:]
        y = jnp.maximum(y + b_refs[0][...], 0.0)
        for i, wr in enumerate(rest, start=1):
            y = jnp.dot(wr[...], y.astype(jnp.bfloat16),
                        preferred_element_type=jnp.float32) + b_refs[i][...]
            y = jnp.maximum(y, 0.0)

        out_ref[0] = y.astype(out_ref.dtype)

    return kernel


# ----------------------------------------------------------------------------
# Parameters (deterministic synthetic init) and BN folding (glue).
# ----------------------------------------------------------------------------
def init_params(key, in_channel, mlp):
    params = []
    last = in_channel
    for out in mlp:
        key, k1, k2, k3, k4, k5, k6 = jax.random.split(key, 7)
        params.append(dict(
            w=jax.random.normal(k1, (out, last), jnp.float32) / jnp.sqrt(last),
            b=0.05 * jax.random.normal(k2, (out,), jnp.float32),
            gamma=1.0 + 0.1 * jax.random.normal(k3, (out,), jnp.float32),
            beta=0.1 * jax.random.normal(k4, (out,), jnp.float32),
            mean=0.05 * jax.random.normal(k5, (out,), jnp.float32),
            var=1.0 + 0.1 * jax.random.uniform(k6, (out,), jnp.float32),
        ))
        last = out
    return params


def fold_bn(p, eps=1e-5):
    """Fold inference BatchNorm into the 1x1 conv: bf16 weight, f32 bias."""
    scale = p["gamma"] / jnp.sqrt(p["var"] + eps)                # (Cout,)
    w_eff = (p["w"] * scale[:, None]).astype(jnp.bfloat16)       # (Cout, Cin)
    b_eff = ((p["b"] - p["mean"]) * scale + p["beta"]).astype(jnp.float32)
    return w_eff, b_eff.reshape(-1, 1)                           # (Cout, 1)


# ----------------------------------------------------------------------------
# Public forward (mirrors PointNetFeaturePropagation.forward).
# ----------------------------------------------------------------------------
def pointnet_fp_forward(xyz1, xyz2, points1, points2, params):
    """xyz1:[B,C,N]  xyz2:[B,C,S]  points1:[B,D1,N]|None  points2:[B,D2,S] -> [B,D',N]"""
    assert len(params) >= 1  # TODO(synk): empty-mlp passthrough not implemented.
    B, C, N = xyz1.shape
    S = xyz2.shape[2]
    D2 = points2.shape[1]
    D1 = points1.shape[1] if points1 is not None else 0
    use_knn = S > 1
    tn = _choose_tile_n(N)
    num_layers = len(params)

    inputs, in_specs = [], []
    if use_knn:
        inputs.append(xyz1)                                      # [B, C, N]
        in_specs.append(pl.BlockSpec((1, C, tn), lambda b, n: (b, 0, n)))
        inputs.append(jnp.transpose(xyz2, (0, 2, 1)))            # tiny: [B, S, C]
        in_specs.append(pl.BlockSpec((1, S, C), lambda b, n: (b, 0, 0)))
    if points1 is not None:
        inputs.append(points1)                                   # [B, D1, N]
        in_specs.append(pl.BlockSpec((1, D1, tn), lambda b, n: (b, 0, n)))
    inputs.append(points2)                                       # [B, D2, S]
    in_specs.append(pl.BlockSpec((1, D2, S), lambda b, n: (b, 0, 0)))

    folded = [fold_bn(p) for p in params]
    w_list, b_list = [], []
    for li, (w_eff, b_eff) in enumerate(folded):
        if li == 0 and points1 is not None:
            w_list.append(w_eff[:, :D1])     # split first-layer weight -> no concat
            w_list.append(w_eff[:, D1:])
        else:
            w_list.append(w_eff)
        b_list.append(b_eff)
    for w in w_list:
        inputs.append(w)
        in_specs.append(pl.BlockSpec(w.shape, lambda b, n: (0, 0)))
    for bb in b_list:
        inputs.append(bb)
        in_specs.append(pl.BlockSpec(bb.shape, lambda b, n: (0, 0)))

    cout = folded[-1][0].shape[0]
    kernel = _make_fused_kernel(num_layers, points1 is not None, use_knn)
    return pl.pallas_call(
        kernel,
        out_shape=jax.ShapeDtypeStruct((B, cout, N), jnp.float32),
        grid=(B, N // tn),
        in_specs=in_specs,
        out_specs=pl.BlockSpec((1, cout, tn), lambda b, n: (b, 0, n)),
        compiler_params=pltpu.CompilerParams(
            dimension_semantics=("parallel", "parallel"),
            vmem_limit_bytes=48 * 1024 * 1024),
    )(*inputs)


# ----------------------------------------------------------------------------
# Pure-JAX f32 reference (for correctness check).
# ----------------------------------------------------------------------------
def reference_forward(xyz1, xyz2, points1, points2, params):
    x1 = jnp.transpose(xyz1, (0, 2, 1))
    x2 = jnp.transpose(xyz2, (0, 2, 1))
    p2 = jnp.transpose(points2, (0, 2, 1))
    B, N, _ = x1.shape
    S = x2.shape[1]
    if S == 1:
        interp = jnp.broadcast_to(p2, (B, N, p2.shape[-1]))
    else:
        d = (-2.0 * jnp.einsum('bnc,bmc->bnm', x1, x2, precision=lax.Precision.HIGHEST)
             + jnp.sum(x1 ** 2, -1)[:, :, None]
             + jnp.sum(x2 ** 2, -1)[:, None, :])
        idx = jnp.argsort(d, axis=-1)[:, :, :3]
        d3 = jnp.take_along_axis(d, idx, axis=-1)
        recip = 1.0 / (d3 + 1e-8)
        weight = recip / jnp.sum(recip, -1, keepdims=True)
        gathered = jax.vmap(lambda p, i: p[i])(p2, idx)          # [B, N, 3, D2]
        interp = jnp.sum(gathered * weight[..., None], axis=2)
    new = interp if points1 is None else jnp.concatenate(
        [jnp.transpose(points1, (0, 2, 1)), interp], axis=-1)
    for p in params:
        scale = p["gamma"] / jnp.sqrt(p["var"] + 1e-5)
        w_eff = p["w"] * scale[:, None]                          # (Cout, Cin) f32
        b_eff = (p["b"] - p["mean"]) * scale + p["beta"]
        new = jnp.maximum(new @ w_eff.T + b_eff, 0.0)
    return jnp.transpose(new, (0, 2, 1))


if __name__ == "__main__":
    B, N, S, C = 2, 16, 8, 3
    D1, D2 = 4, 8
    mlp = [32, 16]

    key = jax.random.PRNGKey(0)
    k1, k2, k3, k4, kp = jax.random.split(key, 5)
    xyz1 = jax.random.normal(k1, (B, C, N), jnp.float32)
    xyz2 = jax.random.normal(k2, (B, C, S), jnp.float32)
    points1 = jax.random.normal(k3, (B, D1, N), jnp.float32)
    points2 = jax.random.normal(k4, (B, D2, S), jnp.float32)
    params = init_params(kp, D1 + D2, mlp)

    out = jax.block_until_ready(pointnet_fp_forward(xyz1, xyz2, points1, points2, params))
    assert out.shape == (B, mlp[-1], N), out.shape
    ref = jax.block_until_ready(reference_forward(xyz1, xyz2, points1, points2, params))
    err = float(jnp.max(jnp.abs(out - ref)))
    assert err < 5e-2, f"max abs error {err}"

    # Also exercise the S == 1 / points1 is None branch of the module.
    params2 = init_params(jax.random.fold_in(kp, 1), D2, mlp)
    xyz2_1, points2_1 = xyz2[:, :, :1], points2[:, :, :1]
    out2 = jax.block_until_ready(
        pointnet_fp_forward(xyz1, xyz2_1, None, points2_1, params2))
    ref2 = jax.block_until_ready(
        reference_forward(xyz1, xyz2_1, None, points2_1, params2))
    err2 = float(jnp.max(jnp.abs(out2 - ref2)))
    assert err2 < 5e-2, f"max abs error (S==1 branch) {err2}"

    print("KERNEL_OK")
</pallas_src>

<mosaic_0001>
module attributes {stable_mosaic.version = 11 : i64} {
  func.func @kernel(%arg0: i32, %arg1: i32, %arg2: memref<1x3x16xf32, #tpu.memory_space<vmem>>, %arg3: memref<1x8x3xf32, #tpu.memory_space<vmem>>, %arg4: memref<1x4x16xf32, #tpu.memory_space<vmem>>, %arg5: memref<1x8x8xf32, #tpu.memory_space<vmem>>, %arg6: memref<32x4xbf16, #tpu.memory_space<vmem>>, %arg7: memref<32x8xbf16, #tpu.memory_space<vmem>>, %arg8: memref<16x32xbf16, #tpu.memory_space<vmem>>, %arg9: memref<32x1xf32, #tpu.memory_space<vmem>>, %arg10: memref<16x1xf32, #tpu.memory_space<vmem>>, %arg11: memref<1x16x16xf32, #tpu.memory_space<vmem>>) attributes {dimension_semantics = [#tpu.dimension_semantics<parallel>, #tpu.dimension_semantics<parallel>], iteration_bounds = array<i64: 2, 1>, scalar_prefetch = 0 : i64, scratch_operands = 0 : i64, tpu.core_type = #tpu.core_type<tc>, window_params = [{transform_indices = @transform_0, window_bounds = array<i64: 1, 3, 16>}, {transform_indices = @transform_1, window_bounds = array<i64: 1, 8, 3>}, {transform_indices = @transform_2, window_bounds = array<i64: 1, 4, 16>}, {transform_indices = @transform_3, window_bounds = array<i64: 1, 8, 8>}, {pipeline_mode = #tpu.pipeline_mode<synchronous>, transform_indices = @transform_4, window_bounds = array<i64: 32, 4>}, {pipeline_mode = #tpu.pipeline_mode<synchronous>, transform_indices = @transform_5, window_bounds = array<i64: 32, 8>}, {pipeline_mode = #tpu.pipeline_mode<synchronous>, transform_indices = @transform_6, window_bounds = array<i64: 16, 32>}, {pipeline_mode = #tpu.pipeline_mode<synchronous>, transform_indices = @transform_7, window_bounds = array<i64: 32, 1>}, {pipeline_mode = #tpu.pipeline_mode<synchronous>, transform_indices = @transform_8, window_bounds = array<i64: 16, 1>}, {transform_indices = @transform_9, window_bounds = array<i64: 1, 16, 16>}]} {
    %c0 = arith.constant 0 : index
    %c0_0 = arith.constant 0 : index
    %c0_1 = arith.constant 0 : index
    %0 = vector.load %arg5[%c0, %c0_0, %c0_1] : memref<1x8x8xf32, #tpu.memory_space<vmem>>, vector<1x8x8xf32>
    %1 = vector.shape_cast %0 : vector<1x8x8xf32> to vector<8x8xf32>
    %c0_2 = arith.constant 0 : index
    %c0_3 = arith.constant 0 : index
    %c0_4 = arith.constant 0 : index
    %2 = vector.load %arg2[%c0_2, %c0_3, %c0_4] : memref<1x3x16xf32, #tpu.memory_space<vmem>>, vector<1x3x16xf32>
    %3 = vector.shape_cast %2 : vector<1x3x16xf32> to vector<3x16xf32>
    %c0_5 = arith.constant 0 : index
    %c0_6 = arith.constant 0 : index
    %c0_7 = arith.constant 0 : index
    %4 = vector.load %arg3[%c0_5, %c0_6, %c0_7] : memref<1x8x3xf32, #tpu.memory_space<vmem>>, vector<1x8x3xf32>
    %5 = vector.shape_cast %4 : vector<1x8x3xf32> to vector<8x3xf32>
    %cst = arith.constant 0.000000e+00 : f32
    %6 = vector.broadcast %cst : f32 to vector<8x16xf32>
    %cst_8 = arith.constant 0.000000e+00 : f32
    %7 = vector.broadcast %cst_8 : f32 to vector<1x16xf32>
    %cst_9 = arith.constant 0.000000e+00 : f32
    %8 = vector.broadcast %cst_9 : f32 to vector<8x1xf32>
    %9 = vector.extract_strided_slice %3 {offsets = [0, 0], sizes = [1, 16], strides = [1, 1]} : vector<3x16xf32> to vector<1x16xf32>
    %10 = vector.extract_strided_slice %5 {offsets = [0, 0], sizes = [8, 1], strides = [1, 1]} : vector<8x3xf32> to vector<8x1xf32>
    %11 = vector.broadcast %10 : vector<8x1xf32> to vector<8x16xf32>
    %12 = vector.broadcast %9 : vector<1x16xf32> to vector<8x16xf32>
    %13 = arith.mulf %11, %12 : vector<8x16xf32>
    %14 = arith.addf %6, %13 : vector<8x16xf32>
    %15 = arith.mulf %9, %9 : vector<1x16xf32>
    %16 = arith.addf %7, %15 : vector<1x16xf32>
    %17 = arith.mulf %10, %10 : vector<8x1xf32>
    %18 = arith.addf %8, %17 : vector<8x1xf32>
    %19 = vector.extract_strided_slice %3 {offsets = [1, 0], sizes = [1, 16], strides = [1, 1]} : vector<3x16xf32> to vector<1x16xf32>
    %20 = vector.extract_strided_slice %5 {offsets = [0, 1], sizes = [8, 1], strides = [1, 1]} : vector<8x3xf32> to vector<8x1xf32>
    %21 = vector.broadcast %20 : vector<8x1xf32> to vector<8x16xf32>
    %22 = vector.broadcast %19 : vector<1x16xf32> to vector<8x16xf32>
    %23 = arith.mulf %21, %22 : vector<8x16xf32>
    %24 = arith.addf %14, %23 : vector<8x16xf32>
    %25 = arith.mulf %19, %19 : vector<1x16xf32>
    %26 = arith.addf %16, %25 : vector<1x16xf32>
    %27 = arith.mulf %20, %20 : vector<8x1xf32>
    %28 = arith.addf %18, %27 : vector<8x1xf32>
    %29 = vector.extract_strided_slice %3 {offsets = [2, 0], sizes = [1, 16], strides = [1, 1]} : vector<3x16xf32> to vector<1x16xf32>
    %30 = vector.extract_strided_slice %5 {offsets = [0, 2], sizes = [8, 1], strides = [1, 1]} : vector<8x3xf32> to vector<8x1xf32>
    %31 = vector.broadcast %30 : vector<8x1xf32> to vector<8x16xf32>
    %32 = vector.broadcast %29 : vector<1x16xf32> to vector<8x16xf32>
    %33 = arith.mulf %31, %32 : vector<8x16xf32>
    %34 = arith.addf %24, %33 : vector<8x16xf32>
    %35 = arith.mulf %29, %29 : vector<1x16xf32>
    %36 = arith.addf %26, %35 : vector<1x16xf32>
    %37 = arith.mulf %30, %30 : vector<8x1xf32>
    %38 = arith.addf %28, %37 : vector<8x1xf32>
    %cst_10 = arith.constant -2.000000e+00 : f32
    %39 = vector.broadcast %cst_10 : f32 to vector<8x16xf32>
    %40 = arith.mulf %39, %34 : vector<8x16xf32>
    %41 = vector.broadcast %36 : vector<1x16xf32> to vector<8x16xf32>
    %42 = arith.addf %40, %41 : vector<8x16xf32>
    %43 = vector.broadcast %38 : vector<8x1xf32> to vector<8x16xf32>
    %44 = arith.addf %42, %43 : vector<8x16xf32>
    %45 = tpu.iota {dimensions = array<i32: 0>} : vector<8x16xi32>
    %cst_11 = arith.constant 0.000000e+00 : f32
    %46 = vector.broadcast %cst_11 : f32 to vector<8x16xf32>
    %cst_12 = arith.constant 0.000000e+00 : f32
    %47 = vector.broadcast %cst_12 : f32 to vector<1x16xf32>
    %cst_13 = arith.constant dense<0x7F800000> : vector<16xf32>
    %48 = vector.multi_reduction <minimumf>, %44, %cst_13 [0] : vector<8x16xf32> to vector<16xf32>
    %49 = vector.shape_cast %48 : vector<16xf32> to vector<1x16xf32>
    %50 = vector.broadcast %49 : vector<1x16xf32> to vector<8x16xf32>
    %51 = arith.cmpf oeq, %44, %50 : vector<8x16xf32>
    %c8_i32 = arith.constant 8 : i32
    %52 = vector.broadcast %c8_i32 : i32 to vector<8x16xi32>
    %53 = arith.select %51, %45, %52 : vector<8x16xi1>, vector<8x16xi32>
    %cst_14 = arith.constant dense<2147483647> : vector<16xi32>
    %54 = vector.multi_reduction <minsi>, %53, %cst_14 [0] : vector<8x16xi32> to vector<16xi32>
    %55 = vector.shape_cast %54 : vector<16xi32> to vector<1x16xi32>
    %56 = vector.broadcast %55 : vector<1x16xi32> to vector<8x16xi32>
    %57 = arith.cmpi eq, %45, %56 : vector<8x16xi32>
    %cst_15 = arith.constant 9.99999993E-9 : f32
    %58 = vector.broadcast %cst_15 : f32 to vector<1x16xf32>
    %59 = arith.addf %49, %58 : vector<1x16xf32>
    %cst_16 = arith.constant 1.000000e+00 : f32
    %60 = vector.broadcast %cst_16 : f32 to vector<1x16xf32>
    %61 = arith.divf %60, %59 : vector<1x16xf32>
    %cst_17 = arith.constant 0.000000e+00 : f32
    %62 = vector.shape_cast %61 : vector<1x16xf32> to vector<1x16xf32>
    %63 = vector.broadcast %62 : vector<1x16xf32> to vector<8x16xf32>
    %64 = vector.broadcast %cst_17 : f32 to vector<8x16xf32>
    %65 = arith.select %57, %63, %64 : vector<8x16xi1>, vector<8x16xf32>
    %66 = arith.addf %46, %65 : vector<8x16xf32>
    %67 = arith.addf %47, %61 : vector<1x16xf32>
    %cst_18 = arith.constant 0x7F800000 : f32
    %68 = vector.broadcast %cst_18 : f32 to vector<8x16xf32>
    %69 = arith.select %57, %68, %44 : vector<8x16xi1>, vector<8x16xf32>
    %cst_19 = arith.constant dense<0x7F800000> : vector<16xf32>
    %70 = vector.multi_reduction <minimumf>, %69, %cst_19 [0] : vector<8x16xf32> to vector<16xf32>
    %71 = vector.shape_cast %70 : vector<16xf32> to vector<1x16xf32>
    %72 = vector.broadcast %71 : vector<1x16xf32> to vector<8x16xf32>
    %73 = arith.cmpf oeq, %69, %72 : vector<8x16xf32>
    %c8_i32_20 = arith.constant 8 : i32
    %74 = vector.broadcast %c8_i32_20 : i32 to vector<8x16xi32>
    %75 = arith.select %73, %45, %74 : vector<8x16xi1>, vector<8x16xi32>
    %cst_21 = arith.constant dense<2147483647> : vector<16xi32>
    %76 = vector.multi_reduction <minsi>, %75, %cst_21 [0] : vector<8x16xi32> to vector<16xi32>
    %77 = vector.shape_cast %76 : vector<16xi32> to vector<1x16xi32>
    %78 = vector.broadcast %77 : vector<1x16xi32> to vector<8x16xi32>
    %79 = arith.cmpi eq, %45, %78 : vector<8x16xi32>
    %cst_22 = arith.constant 9.99999993E-9 : f32
    %80 = vector.broadcast %cst_22 : f32 to vector<1x16xf32>
    %81 = arith.addf %71, %80 : vector<1x16xf32>
    %cst_23 = arith.constant 1.000000e+00 : f32
    %82 = vector.broadcast %cst_23 : f32 to vector<1x16xf32>
    %83 = arith.divf %82, %81 : vector<1x16xf32>
    %cst_24 = arith.constant 0.000000e+00 : f32
    %84 = vector.shape_cast %83 : vector<1x16xf32> to vector<1x16xf32>
    %85 = vector.broadcast %84 : vector<1x16xf32> to vector<8x16xf32>
    %86 = vector.broadcast %cst_24 : f32 to vector<8x16xf32>
    %87 = arith.select %79, %85, %86 : vector<8x16xi1>, vector<8x16xf32>
    %88 = arith.addf %66, %87 : vector<8x16xf32>
    %89 = arith.addf %67, %83 : vector<1x16xf32>
    %cst_25 = arith.constant 0x7F800000 : f32
    %90 = vector.broadcast %cst_25 : f32 to vector<8x16xf32>
    %91 = arith.select %79, %90, %69 : vector<8x16xi1>, vector<8x16xf32>
    %cst_26 = arith.constant dense<0x7F800000> : vector<16xf32>
    %92 = vector.multi_reduction <minimumf>, %91, %cst_26 [0] : vector<8x16xf32> to vector<16xf32>
    %93 = vector.shape_cast %92 : vector<16xf32> to vector<1x16xf32>
    %94 = vector.broadcast %93 : vector<1x16xf32> to vector<8x16xf32>
    %95 = arith.cmpf oeq, %91, %94 : vector<8x16xf32>
    %c8_i32_27 = arith.constant 8 : i32
    %96 = vector.broadcast %c8_i32_27 : i32 to vector<8x16xi32>
    %97 = arith.select %95, %45, %96 : vector<8x16xi1>, vector<8x16xi32>
    %cst_28 = arith.constant dense<2147483647> : vector<16xi32>
    %98 = vector.multi_reduction <minsi>, %97, %cst_28 [0] : vector<8x16xi32> to vector<16xi32>
    %99 = vector.shape_cast %98 : vector<16xi32> to vector<1x16xi32>
    %100 = vector.broadcast %99 : vector<1x16xi32> to vector<8x16xi32>
    %101 = arith.cmpi eq, %45, %100 : vector<8x16xi32>
    %cst_29 = arith.constant 9.99999993E-9 : f32
    %102 = vector.broadcast %cst_29 : f32 to vector<1x16xf32>
    %103 = arith.addf %93, %102 : vector<1x16xf32>
    %cst_30 = arith.constant 1.000000e+00 : f32
    %104 = vector.broadcast %cst_30 : f32 to vector<1x16xf32>
    %105 = arith.divf %104, %103 : vector<1x16xf32>
    %cst_31 = arith.constant 0.000000e+00 : f32
    %106 = vector.shape_cast %105 : vector<1x16xf32> to vector<1x16xf32>
    %107 = vector.broadcast %106 : vector<1x16xf32> to vector<8x16xf32>
    %108 = vector.broadcast %cst_31 : f32 to vector<8x16xf32>
    %109 = arith.select %101, %107, %108 : vector<8x16xi1>, vector<8x16xf32>
    %110 = arith.addf %88, %109 : vector<8x16xf32>
    %111 = arith.addf %89, %105 : vector<1x16xf32>
    %112 = tpu.reciprocal %111 {approx = true} : vector<1x16xf32> -> vector<1x16xf32>
    %113 = vector.broadcast %112 : vector<1x16xf32> to vector<8x16xf32>
    %114 = arith.mulf %110, %113 : vector<8x16xf32>
    %115 = arith.truncf %114 : vector<8x16xf32> to vector<8x16xbf16>
    %116 = arith.truncf %1 : vector<8x8xf32> to vector<8x8xbf16>
    %cst_32 = arith.constant dense<0.000000e+00> : vector<8x16xf32>
    %117 = tpu.matmul %116, %115, %cst_32 {dimension_numbers = #tpu.dot_dimension_numbers<[1], [0], [0], [1], [0, 0, 1, 1], [], []>} : vector<8x8xbf16>, vector<8x16xbf16>, vector<8x16xf32> -> vector<8x16xf32>
    %118 = arith.truncf %117 : vector<8x16xf32> to vector<8x16xbf16>
    %c0_33 = arith.constant 0 : index
    %c0_34 = arith.constant 0 : index
    %c0_35 = arith.constant 0 : index
    %119 = vector.load %arg4[%c0_33, %c0_34, %c0_35] : memref<1x4x16xf32, #tpu.memory_space<vmem>>, vector<1x4x16xf32>
    %120 = vector.shape_cast %119 : vector<1x4x16xf32> to vector<4x16xf32>
    %121 = arith.truncf %120 : vector<4x16xf32> to vector<4x16xbf16>
    %c0_36 = arith.constant 0 : index
    %c0_37 = arith.constant 0 : index
    %122 = vector.load %arg6[%c0_36, %c0_37] : memref<32x4xbf16, #tpu.memory_space<vmem>>, vector<32x4xbf16>
    %cst_38 = arith.constant dense<0.000000e+00> : vector<32x16xf32>
    %123 = tpu.matmul %122, %121, %cst_38 {dimension_numbers = #tpu.dot_dimension_numbers<[1], [0], [0], [1], [0, 0, 1, 1], [], []>} : vector<32x4xbf16>, vector<4x16xbf16>, vector<32x16xf32> -> vector<32x16xf32>
    %c0_39 = arith.constant 0 : index
    %c0_40 = arith.constant 0 : index
    %124 = vector.load %arg7[%c0_39, %c0_40] : memref<32x8xbf16, #tpu.memory_space<vmem>>, vector<32x8xbf16>
    %cst_41 = arith.constant dense<0.000000e+00> : vector<32x16xf32>
    %125 = tpu.matmul %124, %118, %cst_41 {dimension_numbers = #tpu.dot_dimension_numbers<[1], [0], [0], [1], [0, 0, 1, 1], [], []>} : vector<32x8xbf16>, vector<8x16xbf16>, vector<32x16xf32> -> vector<32x16xf32>
    %126 = arith.addf %123, %125 : vector<32x16xf32>
    %c0_42 = arith.constant 0 : index
    %c0_43 = arith.constant 0 : index
    %127 = vector.load %arg9[%c0_42, %c0_43] : memref<32x1xf32, #tpu.memory_space<vmem>>, vector<32x1xf32>
    %128 = vector.broadcast %127 : vector<32x1xf32> to vector<32x16xf32>
    %129 = arith.addf %126, %128 : vector<32x16xf32>
    %cst_44 = arith.constant 0.000000e+00 : f32
    %130 = vector.broadcast %cst_44 : f32 to vector<32x16xf32>
    %131 = arith.maximumf %129, %130 : vector<32x16xf32>
    %c0_45 = arith.constant 0 : index
    %c0_46 = arith.constant 0 : index
    %132 = vector.load %arg8[%c0_45, %c0_46] : memref<16x32xbf16, #tpu.memory_space<vmem>>, vector<16x32xbf16>
    %133 = arith.truncf %131 : vector<32x16xf32> to vector<32x16xbf16>
    %cst_47 = arith.constant dense<0.000000e+00> : vector<16x16xf32>
    %134 = tpu.matmul %132, %133, %cst_47 {dimension_numbers = #tpu.dot_dimension_numbers<[1], [0], [0], [1], [0, 0, 1, 1], [], []>} : vector<16x32xbf16>, vector<32x16xbf16>, vector<16x16xf32> -> vector<16x16xf32>
    %c0_48 = arith.constant 0 : index
    %c0_49 = arith.constant 0 : index
    %135 = vector.load %arg10[%c0_48, %c0_49] : memref<16x1xf32, #tpu.memory_space<vmem>>, vector<16x1xf32>
    %136 = vector.broadcast %135 : vector<16x1xf32> to vector<16x16xf32>
    %137 = arith.addf %134, %136 : vector<16x16xf32>
    %cst_50 = arith.constant 0.000000e+00 : f32
    %138 = vector.broadcast %cst_50 : f32 to vector<16x16xf32>
    %139 = arith.maximumf %137, %138 : vector<16x16xf32>
    %c0_51 = arith.constant 0 : index
    %c0_52 = arith.constant 0 : index
    %c0_53 = arith.constant 0 : index
    %140 = vector.load %arg11[%c0_51, %c0_52, %c0_53] : memref<1x16x16xf32, #tpu.memory_space<vmem>>, vector<1x16x16xf32>
    %141 = vector.shape_cast %140 : vector<1x16x16xf32> to vector<16x16xf32>
    %142 = vector.shape_cast %139 : vector<16x16xf32> to vector<1x16x16xf32>
    tpu.vector_store %arg11[%c0_51, %c0_52, %c0_53], %142 {strides = array<i32>} : memref<1x16x16xf32, #tpu.memory_space<vmem>>, vector<1x16x16xf32>,
    return
  }
  func.func @transform_0(%arg0: i32, %arg1: i32) -> (i32, i32, i32) {
    %c0_i32 = arith.constant 0 : i32
    %c0_i32_0 = arith.constant 0 : i32
    return %arg0, %c0_i32, %arg1 : i32, i32, i32
  }
  func.func @transform_1(%arg0: i32, %arg1: i32) -> (i32, i32, i32) {
    %c0_i32 = arith.constant 0 : i32
    %c0_i32_0 = arith.constant 0 : i32
    %c0_i32_1 = arith.constant 0 : i32
    return %arg0, %c0_i32, %c0_i32_0 : i32, i32, i32
  }
  func.func @transform_2(%arg0: i32, %arg1: i32) -> (i32, i32, i32) {
    %c0_i32 = arith.constant 0 : i32
    %c0_i32_0 = arith.constant 0 : i32
    return %arg0, %c0_i32, %arg1 : i32, i32, i32
  }
  func.func @transform_3(%arg0: i32, %arg1: i32) -> (i32, i32, i32) {
    %c0_i32 = arith.constant 0 : i32
    %c0_i32_0 = arith.constant 0 : i32
    %c0_i32_1 = arith.constant 0 : i32
    return %arg0, %c0_i32, %c0_i32_0 : i32, i32, i32
  }
  func.func @transform_4(%arg0: i32, %arg1: i32) -> (i32, i32) {
    %c0_i32 = arith.constant 0 : i32
    %c0_i32_0 = arith.constant 0 : i32
    %c0_i32_1 = arith.constant 0 : i32
    return %c0_i32, %c0_i32_0 : i32, i32
  }
  func.func @transform_5(%arg0: i32, %arg1: i32) -> (i32, i32) {
    %c0_i32 = arith.constant 0 : i32
    %c0_i32_0 = arith.constant 0 : i32
    %c0_i32_1 = arith.constant 0 : i32
    return %c0_i32, %c0_i32_0 : i32, i32
  }
  func.func @transform_6(%arg0: i32, %arg1: i32) -> (i32, i32) {
    %c0_i32 = arith.constant 0 : i32
    %c0_i32_0 = arith.constant 0 : i32
    %c0_i32_1 = arith.constant 0 : i32
    return %c0_i32, %c0_i32_0 : i32, i32
  }
  func.func @transform_7(%arg0: i32, %arg1: i32) -> (i32, i32) {
    %c0_i32 = arith.constant 0 : i32
    %c0_i32_0 = arith.constant 0 : i32
    %c0_i32_1 = arith.constant 0 : i32
    return %c0_i32, %c0_i32_0 : i32, i32
  }
  func.func @transform_8(%arg0: i32, %arg1: i32) -> (i32, i32) {
    %c0_i32 = arith.constant 0 : i32
    %c0_i32_0 = arith.constant 0 : i32
    %c0_i32_1 = arith.constant 0 : i32
    return %c0_i32, %c0_i32_0 : i32, i32
  }
  func.func @transform_9(%arg0: i32, %arg1: i32) -> (i32, i32, i32) {
    %c0_i32 = arith.constant 0 : i32
    %c0_i32_0 = arith.constant 0 : i32
    return %arg0, %c0_i32, %arg1 : i32, i32, i32
  }
}

</mosaic_0001>

<llo_original>
// kernel: tpu_custom_call.1
$region0: #{tpu_custom_call.1}
  #allocation0 [shape = 'u32[]', space=smem, size = 0x4, offset = 0x4, fixed_abs, tag = 'smem constant byte address 0x4 - core index']
  #allocation1 [shape = 'u32[144,128]{1,0:T(1,128)}', space=vmem, size = 0x12000, scoped, tag = 'internal scratch']
  %s0 = inlined_call_operand.vmem [shape: f32[2,3,16], index: 0, kind: input, shape index: {}]
  %s1 = inlined_call_operand.vmem [shape: f32[2,8,3], index: 1, kind: input, shape index: {}]
  %s2 = inlined_call_operand.vmem [shape: f32[2,4,16], index: 2, kind: input, shape index: {}]
  %s3 = inlined_call_operand.vmem [shape: f32[2,8,8], index: 3, kind: input, shape index: {}]
  %s4 = inlined_call_operand.vmem [shape: bf16[32,4], index: 4, kind: input, shape index: {}]
  %s5 = inlined_call_operand.vmem [shape: bf16[32,8], index: 5, kind: input, shape index: {}]
  %s6 = inlined_call_operand.vmem [shape: bf16[16,32], index: 6, kind: input, shape index: {}]
  %s7 = inlined_call_operand.vmem [shape: f32[32,1], index: 7, kind: input, shape index: {}]
  %s8 = inlined_call_operand.vmem [shape: f32[16,1], index: 8, kind: input, shape index: {}]
  %s9 = inlined_call_operand.hbm [shape: f32[2,16,16], index: 9, kind: output, shape index: {}]
  %s10 = sld [smem:[#allocation0]]
  $region69: #{tpu_custom_call.1} parent=0
    _
  %s12 = ssub.s32 1, %s10
  %s13 = scalar_select 0, %s12, %s10
  $region1: #{tpu_custom_call.1} parent=0
    #allocation2 [shape = 'u8[16384]{0}', space=vmem, size = 0x4000, scoped, tag = 'output window, operand 0']
    #allocation3 [shape = 's32[2]{0}', space=sflag, size = 0x8, scoped, tag = 'scoped memory for tpu_custom_call.1']
    %14 = vsyncpa [#allocation3], 0
    %s15 = scalar_lea.sflag [#allocation3], 1
    %16 = vsyncpa %s15, 0
    loop: start=0, step=1, limit=4
    $region2: #{tpu_custom_call.1} parent=1 // loop_pre_header
      _
    $region3: #{tpu_custom_call.1} parent=1 // loop_header
      %s18 = sphi 0, %s22
      %p19 = scmp.ge.s32.totalorder %s18, 4
      %s25 = sphi 0, %s37
      %s26 = sphi 0, %s33
      %s27 = sphi 0, %s25
      %s28 = sphi 0, %s26
      %s29 = sphi 0, %s27
      %s30 = sphi 0, %s28
      %s42 = sphi 0, %s44
      %s45 = sphi 0, %s42
      %s46 = sphi 0, %s45
      %s62 = sphi 0, %s46
      %s68 = sphi 0, %s70
      %s71 = sphi 0, %s68
      %s72 = sphi 0, %s71
      %s88 = sphi 0, %s72
      %s96 = sphi 0, %s98
      %s99 = sphi 0, %s96
      %s100 = sphi 0, %s99
      %s116 = sphi 0, %s100
      %s122 = sphi 0, %s124
      %s125 = sphi 0, %s122
      %s126 = sphi 0, %s125
      %s142 = sphi 0, %s126
      %s146 = sphi 0, %s146
      %s148 = sphi 0, %s146
      %s149 = sphi 0, %s148
      %s163 = sphi 0, %s149
      %s167 = sphi 0, %s167
      %s169 = sphi 0, %s167
      %s170 = sphi 0, %s169
      %s184 = sphi 0, %s170
      %s188 = sphi 0, %s188
      %s190 = sphi 0, %s188
      %s191 = sphi 0, %s190
      %s205 = sphi 0, %s191
      %s209 = sphi 0, %s209
      %s211 = sphi 0, %s209
      %s212 = sphi 0, %s211
      %s226 = sphi 0, %s212
      %s230 = sphi 0, %s230
      %s232 = sphi 0, %s230
      %s233 = sphi 0, %s232
      %s247 = sphi 0, %s233
      %s255 = sphi 0, %s257
      %s258 = sphi 0, %s255
      %s259 = sphi 0, %s258
      %s275 = sphi 0, %s259
    $region4: #{tpu_custom_call.1} parent=1 // loop_header_branch
      %21 = sbr.rel (%p19) target = $region8
    $region5: #{tpu_custom_call.1} parent=1 // loop_body
      %s23 = ssub.s32 %s18, 1
      %s24 = ssub.s32 %s18, 2
      %s31 = sadd.s32 1, %s26
      %p32 = scmp.ge.s32.totalorder %s31, 1
      %s33 = scalar_select %p32, 0, %s31
      %s34 = sadd.s32 1, %s25
      %s35 = scalar_select %p32, %s34, %s25
      %p36 = scmp.ge.s32.totalorder %s35, 2
      %s37 = scalar_select %p36, 0, %s35
      %s38 = ssub.s32 %s25, %s37
      %s39 = ssub.s32 %s26, %s33
      %s40 = sor.u32 %s38, %s39
      %p41 = scmp.eq.s32.totalorder %s40, 0
      %s43 = sadd.s32 %s42, 1
      %s44 = scalar_select %p41, %s42, %s43
      %p47 = pneg %p41
      %p48 = scmp.eq.s32.totalorder %s18, 1
      %p49 = por %p47, %p48
      %p50 = scmp.ne.s32.totalorder %s42, %s45
      %p51 = scmp.eq.s32.totalorder %s18, 0
      %p52 = por %p50, %p51
      %p53 = scmp.ne.s32.totalorder %s42, %s45
      %p54 = scmp.eq.s32.totalorder %s23, 1
      %p55 = por %p53, %p54
      %p56 = scmp.ne.s32.totalorder %s45, %s46
      %p57 = scmp.eq.s32.totalorder %s23, 0
      %p58 = por %p56, %p57
      %p59 = scmp.ne.s32.totalorder %s45, %s46
      %p60 = scmp.eq.s32.totalorder %s24, 1
      %p61 = por %p59, %p60
      %p63 = scmp.ne.s32.totalorder %s46, %s62
      %p64 = scmp.eq.s32.totalorder %s24, 0
      %p65 = por %p63, %p64
      %s66 = ssub.s32 %s25, %s37
      %p67 = scmp.eq.s32.totalorder %s66, 0
      %s69 = sadd.s32 %s68, 1
      %s70 = scalar_select %p67, %s68, %s69
      %p73 = pneg %p67
      %p74 = scmp.eq.s32.totalorder %s18, 1
      %p75 = por %p73, %p74
      %p76 = scmp.ne.s32.totalorder %s68, %s71
      %p77 = scmp.eq.s32.totalorder %s18, 0
      %p78 = por %p76, %p77
      %p79 = scmp.ne.s32.totalorder %s68, %s71
      %p80 = scmp.eq.s32.totalorder %s23, 1
      %p81 = por %p79, %p80
      %p82 = scmp.ne.s32.totalorder %s71, %s72
      %p83 = scmp.eq.s32.totalorder %s23, 0
      %p84 = por %p82, %p83
      %p85 = scmp.ne.s32.totalorder %s71, %s72
      %p86 = scmp.eq.s32.totalorder %s24, 1
      %p87 = por %p85, %p86
      %p89 = scmp.ne.s32.totalorder %s72, %s88
      %p90 = scmp.eq.s32.totalorder %s24, 0
      %p91 = por %p89, %p90
      %s92 = ssub.s32 %s25, %s37
      %s93 = ssub.s32 %s26, %s33
      %s94 = sor.u32 %s92, %s93
      %p95 = scmp.eq.s32.totalorder %s94, 0
      %s97 = sadd.s32 %s96, 1
      %s98 = scalar_select %p95, %s96, %s97
      %p101 = pneg %p95
      %p102 = scmp.eq.s32.totalorder %s18, 1
      %p103 = por %p101, %p102
      %p104 = scmp.ne.s32.totalorder %s96, %s99
      %p105 = scmp.eq.s32.totalorder %s18, 0
      %p106 = por %p104, %p105
      %p107 = scmp.ne.s32.totalorder %s96, %s99
      %p108 = scmp.eq.s32.totalorder %s23, 1
      %p109 = por %p107, %p108
      %p110 = scmp.ne.s32.totalorder %s99, %s100
      %p111 = scmp.eq.s32.totalorder %s23, 0
      %p112 = por %p110, %p111
      %p113 = scmp.ne.s32.totalorder %s99, %s100
      %p114 = scmp.eq.s32.totalorder %s24, 1
      %p115 = por %p113, %p114
      %p117 = scmp.ne.s32.totalorder %s100, %s116
      %p118 = scmp.eq.s32.totalorder %s24, 0
      %p119 = por %p117, %p118
      %s120 = ssub.s32 %s25, %s37
      %p121 = scmp.eq.s32.totalorder %s120, 0
      %s123 = sadd.s32 %s122, 1
      %s124 = scalar_select %p121, %s122, %s123
      %p127 = pneg %p121
      %p128 = scmp.eq.s32.totalorder %s18, 1
      %p129 = por %p127, %p128
      %p130 = scmp.ne.s32.totalorder %s122, %s125
      %p131 = scmp.eq.s32.totalorder %s18, 0
      %p132 = por %p130, %p131
      %p133 = scmp.ne.s32.totalorder %s122, %s125
      %p134 = scmp.eq.s32.totalorder %s23, 1
      %p135 = por %p133, %p134
      %p136 = scmp.ne.s32.totalorder %s125, %s126
      %p137 = scmp.eq.s32.totalorder %s23, 0
      %p138 = por %p136, %p137
      %p139 = scmp.ne.s32.totalorder %s125, %s126
      %p140 = scmp.eq.s32.totalorder %s24, 1
      %p141 = por %p139, %p140
      %p143 = scmp.ne.s32.totalorder %s126, %s142
      %p144 = scmp.eq.s32.totalorder %s24, 0
      %p145 = por %p143, %p144
      %s147 = sadd.s32 %s146, 1
      %p150 = scmp.eq.s32.totalorder %s18, 1
      %p151 = scmp.ne.s32.totalorder %s146, %s148
      %p152 = scmp.eq.s32.totalorder %s18, 0
      %p153 = por %p151, %p152
      %p154 = scmp.ne.s32.totalorder %s146, %s148
      %p155 = scmp.eq.s32.totalorder %s23, 1
      %p156 = por %p154, %p155
      %p157 = scmp.ne.s32.totalorder %s148, %s149
      %p158 = scmp.eq.s32.totalorder %s23, 0
      %p159 = por %p157, %p158
      %p160 = scmp.ne.s32.totalorder %s148, %s149
      %p161 = scmp.eq.s32.totalorder %s24, 1
      %p162 = por %p160, %p161
      %p164 = scmp.ne.s32.totalorder %s149, %s163
      %p165 = scmp.eq.s32.totalorder %s24, 0
      %p166 = por %p164, %p165
      %s168 = sadd.s32 %s167, 1
      %p171 = scmp.eq.s32.totalorder %s18, 1
      %p172 = scmp.ne.s32.totalorder %s167, %s169
      %p173 = scmp.eq.s32.totalorder %s18, 0
      %p174 = por %p172, %p173
      %p175 = scmp.ne.s32.totalorder %s167, %s169
      %p176 = scmp.eq.s32.totalorder %s23, 1
      %p177 = por %p175, %p176
      %p178 = scmp.ne.s32.totalorder %s169, %s170
      %p179 = scmp.eq.s32.totalorder %s23, 0
      %p180 = por %p178, %p179
      %p181 = scmp.ne.s32.totalorder %s169, %s170
      %p182 = scmp.eq.s32.totalorder %s24, 1
      %p183 = por %p181, %p182
      %p185 = scmp.ne.s32.totalorder %s170, %s184
      %p186 = scmp.eq.s32.totalorder %s24, 0
      %p187 = por %p185, %p186
      %s189 = sadd.s32 %s188, 1
      %p192 = scmp.eq.s32.totalorder %s18, 1
      %p193 = scmp.ne.s32.totalorder %s188, %s190
      %p194 = scmp.eq.s32.totalorder %s18, 0
      %p195 = por %p193, %p194
      %p196 = scmp.ne.s32.totalorder %s188, %s190
      %p197 = scmp.eq.s32.totalorder %s23, 1
      %p198 = por %p196, %p197
      %p199 = scmp.ne.s32.totalorder %s190, %s191
      %p200 = scmp.eq.s32.totalorder %s23, 0
      %p201 = por %p199, %p200
      %p202 = scmp.ne.s32.totalorder %s190, %s191
      %p203 = scmp.eq.s32.totalorder %s24, 1
      %p204 = por %p202, %p203
      %p206 = scmp.ne.s32.totalorder %s191, %s205
      %p207 = scmp.eq.s32.totalorder %s24, 0
      %p208 = por %p206, %p207
      %s210 = sadd.s32 %s209, 1
      %p213 = scmp.eq.s32.totalorder %s18, 1
      %p214 = scmp.ne.s32.totalorder %s209, %s211
      %p215 = scmp.eq.s32.totalorder %s18, 0
      %p216 = por %p214, %p215
      %p217 = scmp.ne.s32.totalorder %s209, %s211
      %p218 = scmp.eq.s32.totalorder %s23, 1
      %p219 = por %p217, %p218
      %p220 = scmp.ne.s32.totalorder %s211, %s212
      %p221 = scmp.eq.s32.totalorder %s23, 0
      %p222 = por %p220, %p221
      %p223 = scmp.ne.s32.totalorder %s211, %s212
      %p224 = scmp.eq.s32.totalorder %s24, 1
      %p225 = por %p223, %p224
      %p227 = scmp.ne.s32.totalorder %s212, %s226
      %p228 = scmp.eq.s32.totalorder %s24, 0
      %p229 = por %p227, %p228
      %s231 = sadd.s32 %s230, 1
      %p234 = scmp.eq.s32.totalorder %s18, 1
      %p235 = scmp.ne.s32.totalorder %s230, %s232
      %p236 = scmp.eq.s32.totalorder %s18, 0
      %p237 = por %p235, %p236
      %p238 = scmp.ne.s32.totalorder %s230, %s232
      %p239 = scmp.eq.s32.totalorder %s23, 1
      %p240 = por %p238, %p239
      %p241 = scmp.ne.s32.totalorder %s232, %s233
      %p242 = scmp.eq.s32.totalorder %s23, 0
      %p243 = por %p241, %p242
      %p244 = scmp.ne.s32.totalorder %s232, %s233
      %p245 = scmp.eq.s32.totalorder %s24, 1
      %p246 = por %p244, %p245
      %p248 = scmp.ne.s32.totalorder %s233, %s247
      %p249 = scmp.eq.s32.totalorder %s24, 0
      %p250 = por %p248, %p249
      %s251 = ssub.s32 %s25, %s37
      %s252 = ssub.s32 %s26, %s33
      %s253 = sor.u32 %s251, %s252
      %p254 = scmp.eq.s32.totalorder %s253, 0
      %s256 = sadd.s32 %s255, 1
      %s257 = scalar_select %p254, %s255, %s256
      %p260 = pneg %p254
      %p261 = scmp.eq.s32.totalorder %s18, 1
      %p262 = por %p260, %p261
      %p263 = scmp.ne.s32.totalorder %s255, %s258
      %p264 = scmp.eq.s32.totalorder %s18, 0
      %p265 = por %p263, %p264
      %p266 = scmp.ne.s32.totalorder %s255, %s258
      %p267 = scmp.eq.s32.totalorder %s23, 1
      %p268 = por %p266, %p267
      %p269 = scmp.ne.s32.totalorder %s258, %s259
      %p270 = scmp.eq.s32.totalorder %s23, 0
      %p271 = por %p269, %p270
      %p272 = scmp.ne.s32.totalorder %s258, %s259
      %p273 = scmp.eq.s32.totalorder %s24, 1
      %p274 = por %p272, %p273
      %p276 = scmp.ne.s32.totalorder %s259, %s275
      %p277 = scmp.eq.s32.totalorder %s24, 0
      %p278 = por %p276, %p277
      %p279 = scmp.le.s32.totalorder 1, %s18
      %p280 = scmp.lt.s32.totalorder %s18, 3
      %p281 = pnand %p279, %p280
      %p282 = pneg %p281
      // Predicated region
      $region9: #{tpu_custom_call.1} parent=5 // pred_check
        _
      $region10: #{tpu_custom_call.1} parent=5 // pred_check_branch
        %284 = sbr.rel (%p281) target = $region12
      $region11: #{tpu_custom_call.1} parent=5 // pred_region
        %s285 = ssub.s32 %s18, 1
        // Predicated region
        $region13: #{tpu_custom_call.1} parent=11 // pred_check
          %p286 = pneg %p159
        $region14: #{tpu_custom_call.1} parent=11 // pred_check_branch
          %288 = sbr.rel (%p286) target = $region16
        $region15: #{tpu_custom_call.1} parent=11 // pred_region
          _
        $region16: #{tpu_custom_call.1} parent=11 // pred_fallthru
          _
        // Predicated region
        $region17: #{tpu_custom_call.1} parent=11 // pred_check
          %p289 = pneg %p180
        $region18: #{tpu_custom_call.1} parent=11 // pred_check_branch
          %291 = sbr.rel (%p289) target = $region20
        $region19: #{tpu_custom_call.1} parent=11 // pred_region
          _
        $region20: #{tpu_custom_call.1} parent=11 // pred_fallthru
          _
        // Predicated region
        $region21: #{tpu_custom_call.1} parent=11 // pred_check
          %p292 = pneg %p201
        $region22: #{tpu_custom_call.1} parent=11 // pred_check_branch
          %294 = sbr.rel (%p292) target = $region24
        $region23: #{tpu_custom_call.1} parent=11 // pred_region
          _
        $region24: #{tpu_custom_call.1} parent=11 // pred_fallthru
          _
        // Predicated region
        $region25: #{tpu_custom_call.1} parent=11 // pred_check
          %p295 = pneg %p222
        $region26: #{tpu_custom_call.1} parent=11 // pred_check_branch
          %297 = sbr.rel (%p295) target = $region28
        $region27: #{tpu_custom_call.1} parent=11 // pred_region
          _
        $region28: #{tpu_custom_call.1} parent=11 // pred_fallthru
          _
        // Predicated region
        $region29: #{tpu_custom_call.1} parent=11 // pred_check
          %p298 = pneg %p243
        $region30: #{tpu_custom_call.1} parent=11 // pred_check_branch
          %300 = sbr.rel (%p298) target = $region32
        $region31: #{tpu_custom_call.1} parent=11 // pred_region
          _
        $region32: #{tpu_custom_call.1} parent=11 // pred_fallthru
          _
      $region12: #{tpu_custom_call.1} parent=5 // pred_fallthru
        _
      %p301 = scmp.lt.s32.totalorder %s18, 2
      // Predicated region
      $region33: #{tpu_custom_call.1} parent=5 // pred_check
        %p302 = pneg %p301
      $region34: #{tpu_custom_call.1} parent=5 // pred_check_branch
        %304 = sbr.rel (%p302) target = $region36
      $region35: #{tpu_custom_call.1} parent=5 // pred_region
        // Predicated region
        $region37: #{tpu_custom_call.1} parent=35 // pred_check
          %p305 = pneg %p52
        $region38: #{tpu_custom_call.1} parent=35 // pred_check_branch
          %307 = sbr.rel (%p305) target = $region40
        $region39: #{tpu_custom_call.1} parent=35 // pred_region
          %p308 = scmp.lt.s32.totalorder %s25, 1
          %s309 = scalar_select %p308, %s25, 1
          %p310 = scmp.lt.s32.totalorder %s26, 0
          %s311 = scalar_select %p310, %s26, 0
          %s312 = sadd.s32 %s311, %s309
          %s313 = smul.addr %s312, 4
          %s314 = scalar_lea.vmem %s0, %s313
        $region40: #{tpu_custom_call.1} parent=35 // pred_fallthru
          _
        // Predicated region
        $region41: #{tpu_custom_call.1} parent=35 // pred_check
          %p315 = pneg %p78
        $region42: #{tpu_custom_call.1} parent=35 // pred_check_branch
          %317 = sbr.rel (%p315) target = $region44
        $region43: #{tpu_custom_call.1} parent=35 // pred_region
          %p318 = scmp.lt.s32.totalorder %s25, 1
          %s319 = scalar_select %p318, %s25, 1
          %s320 = smul.addr %s319, 8
          %s321 = scalar_lea.vmem %s1, %s320
        $region44: #{tpu_custom_call.1} parent=35 // pred_fallthru
          _
        // Predicated region
        $region45: #{tpu_custom_call.1} parent=35 // pred_check
          %p322 = pneg %p106
        $region46: #{tpu_custom_call.1} parent=35 // pred_check_branch
          %324 = sbr.rel (%p322) target = $region48
        $region47: #{tpu_custom_call.1} parent=35 // pred_region
          %p325 = scmp.lt.s32.totalorder %s25, 1
          %s326 = scalar_select %p325, %s25, 1
          %p327 = scmp.lt.s32.totalorder %s26, 0
          %s328 = scalar_select %p327, %s26, 0
          %s329 = sadd.s32 %s328, %s326
          %s330 = smul.addr %s329, 4
          %s331 = scalar_lea.vmem %s2, %s330
        $region48: #{tpu_custom_call.1} parent=35 // pred_fallthru
          _
        // Predicated region
        $region49: #{tpu_custom_call.1} parent=35 // pred_check
          %p332 = pneg %p132
        $region50: #{tpu_custom_call.1} parent=35 // pred_check_branch
          %334 = sbr.rel (%p332) target = $region52
        $region51: #{tpu_custom_call.1} parent=35 // pred_region
          %p335 = scmp.lt.s32.totalorder %s25, 1
          %s336 = scalar_select %p335, %s25, 1
          %s337 = smul.addr %s336, 8
          %s338 = scalar_lea.vmem %s3, %s337
        $region52: #{tpu_custom_call.1} parent=35 // pred_fallthru
          _
      $region36: #{tpu_custom_call.1} parent=5 // pred_fallthru
        _
      %p339 = scmp.le.s32.totalorder 1, %s18
      %p340 = scmp.lt.s32.totalorder %s18, 3
      %p341 = pnand %p339, %p340
      %p342 = pneg %p341
      // Predicated region
      $region53: #{tpu_custom_call.1} parent=5 // pred_check
        _
      $region54: #{tpu_custom_call.1} parent=5 // pred_check_branch
        %344 = sbr.rel (%p341) target = $region56
      $region55: #{tpu_custom_call.1} parent=5 // pred_region
        %s345 = ssub.s32 %s18, 1
        %p346 = scmp.lt.s32.totalorder %s27, 1
        %s347 = scalar_select %p346, %s27, 1
        %p348 = scmp.lt.s32.totalorder %s28, 0
        %s349 = scalar_select %p348, %s28, 0
        %s350 = sadd.s32 %s349, %s347
        %s351 = smul.addr %s350, 4
        %s352 = scalar_lea.vmem %s0, %s351
        %p353 = pneg %p58
        %p354 = pneg %p55
        %p355 = scmp.lt.s32.totalorder %s27, 1
        %s356 = scalar_select %p355, %s27, 1
        %s357 = smul.addr %s356, 8
        %s358 = scalar_lea.vmem %s1, %s357
        %p359 = pneg %p84
        %p360 = pneg %p81
        %p361 = scmp.lt.s32.totalorder %s27, 1
        %s362 = scalar_select %p361, %s27, 1
        %p363 = scmp.lt.s32.totalorder %s28, 0
        %s364 = scalar_select %p363, %s28, 0
        %s365 = sadd.s32 %s364, %s362
        %s366 = smul.addr %s365, 4
        %s367 = scalar_lea.vmem %s2, %s366
        %p368 = pneg %p112
        %p369 = pneg %p109
        %p370 = scmp.lt.s32.totalorder %s27, 1
        %s371 = scalar_select %p370, %s27, 1
        %s372 = smul.addr %s371, 8
        %s373 = scalar_lea.vmem %s3, %s372
        %p374 = pneg %p138
        %p375 = pneg %p135
        %p376 = pneg %p159
        %p377 = pneg %p156
        %p378 = pneg %p180
        %p379 = pneg %p177
        %p380 = pneg %p201
        %p381 = pneg %p198
        %p382 = pneg %p222
        %p383 = pneg %p219
        %p384 = pneg %p243
        %p385 = pneg %p240
        %p386 = pneg %p271
        %p387 = pneg %p268
        %s388 = sand.u32 %s258, 1
        %s389 = scalar_lea.sflag [#allocation3], %s388
        %s390 = sand.u32 %s258, 1
        %s391 = smul.addr %s390, 16
        %s392 = scalar_lea.vmem [#allocation2], %s391
        %p393 = scmp.lt.s32.totalorder %s27, 1
        %s394 = scalar_select %p393, %s27, 1
        %p395 = scmp.lt.s32.totalorder %s28, 0
        %s396 = scalar_select %p395, %s28, 0
        %s397 = sadd.s32 %s396, %s394
        %s398 = smul.addr %s397, 4
        %s399 = scalar_lea.vmem %s0, %s398
        %p400 = scmp.lt.s32.totalorder %s27, 1
        %s401 = scalar_select %p400, %s27, 1
        %s402 = smul.addr %s401, 8
        %s403 = scalar_lea.vmem %s1, %s402
        %p404 = scmp.lt.s32.totalorder %s27, 1
        %s405 = scalar_select %p404, %s27, 1
        %p406 = scmp.lt.s32.totalorder %s28, 0
        %s407 = scalar_select %p406, %s28, 0
        %s408 = sadd.s32 %s407, %s405
        %s409 = smul.addr %s408, 4
        %s410 = scalar_lea.vmem %s2, %s409
        %p411 = scmp.lt.s32.totalorder %s27, 1
        %s412 = scalar_select %p411, %s27, 1
        %s413 = smul.addr %s412, 8
        %s414 = scalar_lea.vmem %s3, %s413
        %v416 = vld [vmem:[%s414] sm:$0xff]
        %v417 = vld [vmem:[%s399] sm:$0x7]
        %v418 = vld [vmem:[%s403] sm:$0xff]
        %420 = vset.pattern.permute.xlu0 0
        %421 = vperm.xlu0 %420, %v418
        %v422 = vpop.permute.xlu0 %421
        %v424 = vlaneseq
        %v425 = vshrl.u32 %v424, 7
        %v426 = vsub.s32 0, %v425
        %v427 = vrot.slane %v417, %v426
        %v428 = vmul.f32 %v422, %v427
        %v429 = vadd.f32 %v428, 0.0
        %v430 = vmul.f32 %v417, %v417
        %v431 = vadd.f32 %v430, 0.0
        %v432 = vmul.f32 %v418, %v418
        %v433 = vadd.f32 %v432, 0.0
        %434 = vset.pattern.permute.xlu0 1
        %435 = vperm.xlu0 %434, %v418
        %v436 = vpop.permute.xlu0 %435
        %v438 = vlaneseq
        %v439 = vshrl.u32 %v438, 7
        %v440 = vsub.s32 1, %v439
        %v441 = vrot.slane %v417, %v440
        %v442 = vmul.f32 %v436, %v441
        %v443 = vadd.f32 %v429, %v442
        %v445 = vrot.slane %v430, 1
        %v447 = vadd.f32 %v431, %v445
        %449 = vrot.lane.b32.xlu0 %v432, 127
        %v450 = vpop.permute.xlu0 %449
        %v452 = vadd.f32 %v433, %v450
        %453 = vset.pattern.permute.xlu0 2
        %454 = vperm.xlu0 %453, %v418
        %v455 = vpop.permute.xlu0 %454
        %v457 = vlaneseq
        %v458 = vshrl.u32 %v457, 7
        %v459 = vsub.s32 2, %v458
        %v460 = vrot.slane %v417, %v459
        %v461 = vmul.f32 %v455, %v460
        %v462 = vadd.f32 %v443, %v461
        %v463 = vrot.slane %v430, 2
        %v465 = vadd.f32 %v447, %v463
        %466 = vrot.lane.b32.xlu0 %v432, 126
        %v467 = vpop.permute.xlu0 %466
        %v469 = vadd.f32 %v452, %v467
        %v470 = vmul.f32 %v462, -2.0
        %v471 = vlaneseq
        %v472 = vshrl.u32 %v471, 7
        %v473 = vsub.s32 0, %v472
        %v474 = vrot.slane %v465, %v473
        %v475 = vadd.f32 %v470, %v474
        %477 = vset.pattern.permute.xlu0 0
        %478 = vperm.xlu0 %477, %v469
        %v479 = vpop.permute.xlu0 %478
        %v481 = vadd.f32 %v475, %v479
        %v482 = vlaneseq
        %v483 = vshrl.u32 %v482, 7
        %vm484 = vcmask 130048
        %v485 = vsel %vm484, %v481, inf
        %v486 = vrot.slane %v485, 4
        %v487 = vmin.f32 %v485, %v486
        %v488 = vrot.slane %v487, 2
        %v489 = vmin.f32 %v487, %v488
        %v490 = vrot.slane %v489, 1
        %v491 = vmin.f32 %v489, %v490
        %vm492 = vcmp.eq.f32.partialorder %v481, %v491
        %v493 = vsel %vm492, %v483, 8
        %v494 = vsel %vm484, %v493, 2147483647
        %v495 = vrot.slane %v494, 4
        %vm496 = vcmp.lt.s32.totalorder %v494, %v495
        %v497 = vsel %vm496, %v494, %v495
        %v498 = vrot.slane %v497, 2
        %vm499 = vcmp.lt.s32.totalorder %v497, %v498
        %v500 = vsel %vm499, %v497, %v498
        %v501 = vrot.slane %v500, 1
        %vm502 = vcmp.lt.s32.totalorder %v500, %v501
        %v503 = vsel %vm502, %v500, %v501
        %vm504 = vcmp.eq.s32.totalorder %v483, %v503
        %v505 = vadd.f32 %v491, 1e-08
        %v506 = vrcp.pop %v505
        %v507 = vmul.f32 1.0, %v506
        %v508 = vsel %vm504, %v507, 0.0
        %v509 = vadd.f32 %v508, 0.0
        %v510 = vadd.f32 %v507, 0.0
        %v511 = vsel %vm504, inf, %v481
        %v512 = vsel %vm484, %v511, inf
        %v513 = vrot.slane %v512, 4
        %v514 = vmin.f32 %v512, %v513
        %v515 = vrot.slane %v514, 2
        %v516 = vmin.f32 %v514, %v515
        %v517 = vrot.slane %v516, 1
        %v518 = vmin.f32 %v516, %v517
        %vm519 = vcmp.eq.f32.partialorder %v511, %v518
        %v520 = vsel %vm519, %v483, 8
        %v521 = vsel %vm484, %v520, 2147483647
        %v522 = vrot.slane %v521, 4
        %vm523 = vcmp.lt.s32.totalorder %v521, %v522
        %v524 = vsel %vm523, %v521, %v522
        %v525 = vrot.slane %v524, 2
        %vm526 = vcmp.lt.s32.totalorder %v524, %v525
        %v527 = vsel %vm526, %v524, %v525
        %v528 = vrot.slane %v527, 1
        %vm529 = vcmp.lt.s32.totalorder %v527, %v528
        %v530 = vsel %vm529, %v527, %v528
        %vm531 = vcmp.eq.s32.totalorder %v483, %v530
        %v532 = vadd.f32 %v518, 1e-08
        %v533 = vrcp.pop %v532
        %v534 = vmul.f32 1.0, %v533
        %v535 = vsel %vm531, %v534, 0.0
        %v536 = vadd.f32 %v509, %v535
        %v537 = vadd.f32 %v510, %v534
        %v538 = vsel %vm531, inf, %v511
        %v539 = vsel %vm484, %v538, inf
        %v540 = vrot.slane %v539, 4
        %v541 = vmin.f32 %v539, %v540
        %v542 = vrot.slane %v541, 2
        %v543 = vmin.f32 %v541, %v542
        %v544 = vrot.slane %v543, 1
        %v545 = vmin.f32 %v543, %v544
        %vm546 = vcmp.eq.f32.partialorder %v538, %v545
        %v547 = vsel %vm546, %v483, 8
        %v548 = vsel %vm484, %v547, 2147483647
        %v549 = vrot.slane %v548, 4
        %vm550 = vcmp.lt.s32.totalorder %v548, %v549
        %v551 = vsel %vm550, %v548, %v549
        %v552 = vrot.slane %v551, 2
        %vm553 = vcmp.lt.s32.totalorder %v551, %v552
        %v554 = vsel %vm553, %v551, %v552
        %v555 = vrot.slane %v554, 1
        %vm556 = vcmp.lt.s32.totalorder %v554, %v555
        %v557 = vsel %vm556, %v554, %v555
        %vm558 = vcmp.eq.s32.totalorder %v483, %v557
        %v559 = vadd.f32 %v545, 1e-08
        %v560 = vrcp.pop %v559
        %v561 = vmul.f32 1.0, %v560
        %v562 = vsel %vm558, %v561, 0.0
        %v563 = vadd.f32 %v536, %v562
        %v564 = vadd.f32 %v537, %v561
        %v565 = vrcp.pop %v564
        %v566 = vmul.f32 %v563, %v565
        %v567 = vpack.c.bf16 %v566, %v566
        %v568 = vpack.c.bf16 %v416, %v416
        %vm569 = vcmask 64512
        %v571 = vsel %vm569, %v568, 0
        %vm573 = vcmask 1043456
        %v575 = vsel %vm573, %v567, 0
        %577 = vmatprep.subr.bf16.mxu0 0
        %578 = vmatpush1.bf16.msra.mxu0 0
        %579 = vmatprep.subr.bf16.mxu0 0
        %580 = vmatpush1.bf16.msra.mxu0 0
        %581 = vmatprep.subr.bf16.mxu0 0
        %582 = vmatpush1.bf16.msra.mxu0 0
        %583 = vmatprep.subr.bf16.mxu0 0
        %584 = vmatpush1.bf16.msra.mxu0 0
        %585 = vmatprep.subr.bf16.mxu0 0
        %586 = vmatpush1.bf16.msra.mxu0 0
        %587 = vmatprep.subr.bf16.mxu0 0
        %588 = vmatpush1.bf16.msra.mxu0 0
        %589 = vmatprep.subr.bf16.mxu0 0
        %590 = vmatpush1.bf16.msra.mxu0 0
        %591 = vmatprep.subr.bf16.mxu0 0
        %592 = vmatpush1.bf16.msra.mxu0 %v575
        %593 = vmatprep.subr.bf16.mxu0 0
        %594 = vmatpush2.bf16.msra.mxu0 0
        %595 = vmatprep.subr.bf16.mxu0 0
        %596 = vmatpush2.bf16.msra.mxu0 0
        %597 = vmatprep.subr.bf16.mxu0 0
        %598 = vmatpush2.bf16.msra.mxu0 0
        %599 = vmatprep.subr.bf16.mxu0 0
        %600 = vmatpush2.bf16.msra.mxu0 0
        %601 = vmatprep.subr.bf16.mxu0 0
        %602 = vmatpush2.bf16.msra.mxu0 0
        %603 = vmatprep.subr.bf16.mxu0 0
        %604 = vmatpush2.bf16.msra.mxu0 0
        %605 = vmatprep.subr.bf16.mxu0 0
        %606 = vmatpush2.bf16.msra.mxu0 0
        %607 = vmatprep.subr.bf16.mxu0 0
        %608 = vmatpush2.bf16.msra.mxu0 0
        %609 = vmatprep.mubr.bf16.mxu0 0
        %610 = vmatmul.mubr.bf16.gmra.mxu0 %v571
        %v611 = vpop.f32.mrf.mxu0
        %v612 = vadd.f32 0.0, %v611
        %v613 = vpop.f32.mrf.mxu0
        %v614 = vpop.f32.mrf.mxu0
        %v615 = vpop.f32.mrf.mxu0
        %616 = vdwg.mxu0
        %v617 = vpack.c.bf16 %v612, %v612
        %v618 = vld [vmem:[%s410] sm:$0xf]
        %v619 = vpack.c.bf16 %v618, %v618
        %v620 = vld [vmem:[%s4] sm:$0xf]
        %v621 = vld [vmem:[%s4 + $0x4] sm:$0xf]
        %v622 = vld [vmem:[%s4 + $0x8] sm:$0xf]
        %v623 = vld [vmem:[%s4 + $0xc] sm:$0xf]
        %v624 = vld [vmem:[%s5] sm:$0xf]
        %v625 = vld [vmem:[%s5 + $0x4] sm:$0xf]
        %v626 = vld [vmem:[%s5 + $0x8] sm:$0xf]
        %v627 = vld [vmem:[%s5 + $0xc] sm:$0xf]
        %v632 = vunpack.c.l.b16 %v624
        %v633 = vunpack.c.l.b16 %v625
        %v634 = vunpack.c.l.b16 %v626
        %v635 = vunpack.c.l.b16 %v627
        %v636 = vpack.c.b16 %v633, %v632
        %v637 = vpack.c.b16 %v635, %v634
        %v639 = vsel %vm569, %v636, 0
        %v642 = vsel %vm569, %v637, 0
        %v645 = vsel %vm573, %v617, 0
        %647 = vmatprep.subr.bf16.mxu0 0
        %648 = vmatpush1.bf16.msra.mxu0 0
        %649 = vmatprep.subr.bf16.mxu0 0
        %650 = vmatpush1.bf16.msra.mxu0 0
        %651 = vmatprep.subr.bf16.mxu0 0
        %652 = vmatpush1.bf16.msra.mxu0 0
        %653 = vmatprep.subr.bf16.mxu0 0
        %654 = vmatpush1.bf16.msra.mxu0 0
        %655 = vmatprep.subr.bf16.mxu0 0
        %656 = vmatpush1.bf16.msra.mxu0 0
        %657 = vmatprep.subr.bf16.mxu0 0
        %658 = vmatpush1.bf16.msra.mxu0 0
        %659 = vmatprep.subr.bf16.mxu0 0
        %660 = vmatpush1.bf16.msra.mxu0 0
        %661 = vmatprep.subr.bf16.mxu0 0
        %662 = vmatpush1.bf16.msra.mxu0 %v645
        %663 = vmatprep.subr.bf16.mxu0 0
        %664 = vmatpush2.bf16.msra.mxu0 0
        %665 = vmatprep.subr.bf16.mxu0 0
        %666 = vmatpush2.bf16.msra.mxu0 0
        %667 = vmatprep.subr.bf16.mxu0 0
        %668 = vmatpush2.bf16.msra.mxu0 0
        %669 = vmatprep.subr.bf16.mxu0 0
        %670 = vmatpush2.bf16.msra.mxu0 0
        %671 = vmatprep.subr.bf16.mxu0 0
        %672 = vmatpush2.bf16.msra.mxu0 0
        %673 = vmatprep.subr.bf16.mxu0 0
        %674 = vmatpush2.bf16.msra.mxu0 0
        %675 = vmatprep.subr.bf16.mxu0 0
        %676 = vmatpush2.bf16.msra.mxu0 0
        %677 = vmatprep.subr.bf16.mxu0 0
        %678 = vmatpush2.bf16.msra.mxu0 0
        %679 = vmatprep.mubr.bf16.mxu0 0
        %680 = vmatmul.mubr.bf16.gmra.mxu0 %v639
        %v681 = vpop.f32.mrf.mxu0
        %v682 = vadd.f32 0.0, %v681
        %v683 = vpop.f32.mrf.mxu0
        %v684 = vpop.f32.mrf.mxu0
        %v685 = vadd.f32 0.0, %v684
        %v686 = vpop.f32.mrf.mxu0
        %687 = vmatprep.mubr.bf16.mxu0 0
        %688 = vmatmul.mubr.bf16.gmra.mxu0 %v642
        %v689 = vpop.f32.mrf.mxu0
        %v690 = vadd.f32 0.0, %v689
        %v691 = vpop.f32.mrf.mxu0
        %v692 = vpop.f32.mrf.mxu0
        %v693 = vadd.f32 0.0, %v692
        %v694 = vpop.f32.mrf.mxu0
        %695 = vdwg.mxu0
        %v700 = vunpack.c.l.b16 %v620
        %v701 = vunpack.c.l.b16 %v621
        %v702 = vunpack.c.l.b16 %v622
        %v703 = vunpack.c.l.b16 %v623
        %v704 = vpack.c.b16 %v701, %v700
        %v705 = vpack.c.b16 %v703, %v702
        %vm706 = vcmask 31744
        %v708 = vsel %vm706, %v704, 0
        %v711 = vsel %vm706, %v705, 0
        %vm713 = vcmask 1041408
        %v715 = vsel %vm713, %v619, 0
        %717 = vmatprep.subr.bf16.mxu0 0
        %718 = vmatpush1.bf16.msra.mxu0 0
        %719 = vmatprep.subr.bf16.mxu0 0
        %720 = vmatpush1.bf16.msra.mxu0 0
        %721 = vmatprep.subr.bf16.mxu0 0
        %722 = vmatpush1.bf16.msra.mxu0 0
        %723 = vmatprep.subr.bf16.mxu0 0
        %724 = vmatpush1.bf16.msra.mxu0 0
        %725 = vmatprep.subr.bf16.mxu0 0
        %726 = vmatpush1.bf16.msra.mxu0 0
        %727 = vmatprep.subr.bf16.mxu0 0
        %728 = vmatpush1.bf16.msra.mxu0 0
        %729 = vmatprep.subr.bf16.mxu0 0
        %730 = vmatpush1.bf16.msra.mxu0 0
        %731 = vmatprep.subr.bf16.mxu0 0
        %732 = vmatpush1.bf16.msra.mxu0 %v715
        %733 = vmatprep.subr.bf16.mxu0 0
        %734 = vmatpush2.bf16.msra.mxu0 0
        %735 = vmatprep.subr.bf16.mxu0 0
        %736 = vmatpush2.bf16.msra.mxu0 0
        %737 = vmatprep.subr.bf16.mxu0 0
        %738 = vmatpush2.bf16.msra.mxu0 0
        %739 = vmatprep.subr.bf16.mxu0 0
        %740 = vmatpush2.bf16.msra.mxu0 0
        %741 = vmatprep.subr.bf16.mxu0 0
        %742 = vmatpush2.bf16.msra.mxu0 0
        %743 = vmatprep.subr.bf16.mxu0 0
        %744 = vmatpush2.bf16.msra.mxu0 0
        %745 = vmatprep.subr.bf16.mxu0 0
        %746 = vmatpush2.bf16.msra.mxu0 0
        %747 = vmatprep.subr.bf16.mxu0 0
        %748 = vmatpush2.bf16.msra.mxu0 0
        %749 = vmatprep.mubr.bf16.mxu0 0
        %750 = vmatmul.mubr.bf16.gmra.mxu0 %v708
        %v751 = vpop.f32.mrf.mxu0
        %v752 = vadd.f32 %v682, %v751
        %v753 = vpop.f32.mrf.mxu0
        %v754 = vpop.f32.mrf.mxu0
        %v755 = vadd.f32 %v685, %v754
        %v756 = vpop.f32.mrf.mxu0
        %757 = vmatprep.mubr.bf16.mxu0 0
        %758 = vmatmul.mubr.bf16.gmra.mxu0 %v711
        %v759 = vpop.f32.mrf.mxu0
        %v760 = vadd.f32 %v690, %v759
        %v761 = vpop.f32.mrf.mxu0
        %v762 = vpop.f32.mrf.mxu0
        %v763 = vadd.f32 %v693, %v762
        %v764 = vpop.f32.mrf.mxu0
        %765 = vdwg.mxu0
        %v766 = vld [vmem:[%s7] sm:$0xff]
        %v767 = vld [vmem:[%s7 + $0x8] sm:$0xff]
        %v768 = vld [vmem:[%s7 + $0x10] sm:$0xff]
        %v769 = vld [vmem:[%s7 + $0x18] sm:$0xff]
        %771 = vset.pattern.permute.xlu0 0
        %772 = vperm.xlu0 %771, %v766
        %v773 = vpop.permute.xlu0 %772
        %776 = vset.pattern.permute.xlu0 0
        %777 = vperm.xlu0 %776, %v767
        %v778 = vpop.permute.xlu0 %777
        %781 = vset.pattern.permute.xlu0 0
        %782 = vperm.xlu0 %781, %v768
        %v783 = vpop.permute.xlu0 %782
        %786 = vset.pattern.permute.xlu0 0
        %787 = vperm.xlu0 %786, %v769
        %v788 = vpop.permute.xlu0 %787
        %v790 = vadd.f32 %v752, %v773
        %v791 = vadd.f32 %v755, %v778
        %v792 = vadd.f32 %v760, %v783
        %v793 = vadd.f32 %v763, %v788
        %v794 = vmax.f32 %v790, 0.0
        %v795 = vmax.f32 %v791, 0.0
        %v796 = vmax.f32 %v792, 0.0
        %v797 = vmax.f32 %v793, 0.0
        %v798 = vld [vmem:[%s6] sm:$0xf]
        %v799 = vld [vmem:[%s6 + $0x4] sm:$0xf]
        %v800 = vpack.c.bf16 %v795, %v794
        %v801 = vpack.c.bf16 %v797, %v796
        %v802 = vld [vmem:[%s8] sm:$0xff]
        %v803 = vld [vmem:[%s8 + $0x8] sm:$0xff]
        %805 = vset.pattern.permute.xlu0 0
        %806 = vperm.xlu0 %805, %v802
        %v807 = vpop.permute.xlu0 %806
        %810 = vset.pattern.permute.xlu0 0
        %811 = vperm.xlu0 %810, %v803
        %v812 = vpop.permute.xlu0 %811
        %v816 = vunpack.c.l.b16 %v798
        %v817 = vunpack.c.l.b16 %v799
        %v818 = vpack.c.b16 %v817, %v816
        %vm819 = vcmask 261120
        %v821 = vsel %vm819, %v818, 0
        %823 = vmatprep.subr.bf16.mxu0 0
        %824 = vmatpush1.bf16.msra.mxu0 0
        %825 = vmatprep.subr.bf16.mxu0 0
        %826 = vmatpush1.bf16.msra.mxu0 0
        %827 = vmatprep.subr.bf16.mxu0 0
        %828 = vmatpush1.bf16.msra.mxu0 0
        %829 = vmatprep.subr.bf16.mxu0 0
        %830 = vmatpush1.bf16.msra.mxu0 0
        %831 = vmatprep.subr.bf16.mxu0 0
        %832 = vmatpush1.bf16.msra.mxu0 0
        %833 = vmatprep.subr.bf16.mxu0 0
        %834 = vmatpush1.bf16.msra.mxu0 0
        %835 = vmatprep.subr.bf16.mxu0 0
        %836 = vmatpush1.bf16.msra.mxu0 %v801
        %837 = vmatprep.subr.bf16.mxu0 0
        %838 = vmatpush1.bf16.msra.mxu0 %v800
        %839 = vmatprep.subr.bf16.mxu0 0
        %840 = vmatpush2.bf16.msra.mxu0 0
        %841 = vmatprep.subr.bf16.mxu0 0
        %842 = vmatpush2.bf16.msra.mxu0 0
        %843 = vmatprep.subr.bf16.mxu0 0
        %844 = vmatpush2.bf16.msra.mxu0 0
        %845 = vmatprep.subr.bf16.mxu0 0
        %846 = vmatpush2.bf16.msra.mxu0 0
        %847 = vmatprep.subr.bf16.mxu0 0
        %848 = vmatpush2.bf16.msra.mxu0 0
        %849 = vmatprep.subr.bf16.mxu0 0
        %850 = vmatpush2.bf16.msra.mxu0 0
        %851 = vmatprep.subr.bf16.mxu0 0
        %852 = vmatpush2.bf16.msra.mxu0 0
        %853 = vmatprep.subr.bf16.mxu0 0
        %854 = vmatpush2.bf16.msra.mxu0 0
        %855 = vmatprep.mubr.bf16.mxu0 0
        %856 = vmatmul.mubr.bf16.gmra.mxu0 %v821
        %v857 = vpop.f32.mrf.mxu0
        %v858 = vadd.f32 %v807, %v857
        %v859 = vpop.f32.mrf.mxu0
        %v860 = vpop.f32.mrf.mxu0
        %v861 = vadd.f32 %v812, %v860
        %v862 = vpop.f32.mrf.mxu0
        %863 = vdwg.mxu0
        %v864 = vmax.f32 %v858, 0.0
        %v865 = vmax.f32 %v861, 0.0
        %866 = vst.msk [vmem:[%s392] sm:$0xff] %vm484, %v864
        %867 = vst.msk [vmem:[%s392 + $0x8] sm:$0xff] %vm484, %v865
        %s868 = sand.u32 %s258, 1
        %s869 = scalar_lea.sflag [#allocation3], %s868
        %s870 = sand.u32 %s258, 1
        %s871 = smul.addr %s870, 16
        %s872 = scalar_lea.vmem [#allocation2], %s871
        // Predicated region
        $region57: #{tpu_custom_call.1} parent=55 // pred_check
          %p873 = pneg %p268
        $region58: #{tpu_custom_call.1} parent=55 // pred_check_branch
          %875 = sbr.rel (%p873) target = $region60
        $region59: #{tpu_custom_call.1} parent=55 // pred_region
          %s877 = ssub.s32 256, 256
          %878 = vsyncadd %s869, %s877
          %s879 = smul.addr %s27, 2
          %s880 = sadd.s32 %s28, %s879
          %s881 = smul.addr %s880, 128
          %s882 = scalar_lea.hbm %s9, %s881
          %s883 = sshll.u32 %s872, 4
          %s884 = int_to_ptr.vmem [resolvable:$true] %s883
          %889 = dma.vmem_to_hbm [thread:$0]  %s884, 256, %s882, %s869, 128, 128, 8
        $region60: #{tpu_custom_call.1} parent=55 // pred_fallthru
          _
      $region56: #{tpu_custom_call.1} parent=5 // pred_fallthru
        _
      %p890 = scmp.le.s32.totalorder 2, %s18
      // Predicated region
      $region61: #{tpu_custom_call.1} parent=5 // pred_check
        %p891 = pneg %p890
      $region62: #{tpu_custom_call.1} parent=5 // pred_check_branch
        %893 = sbr.rel (%p891) target = $region64
      $region63: #{tpu_custom_call.1} parent=5 // pred_region
        %s894 = ssub.s32 %s18, 2
        // Predicated region
        $region65: #{tpu_custom_call.1} parent=63 // pred_check
          %p895 = pneg %p274
        $region66: #{tpu_custom_call.1} parent=63 // pred_check_branch
          %897 = sbr.rel (%p895) target = $region68
        $region67: #{tpu_custom_call.1} parent=63 // pred_region
          %s898 = sand.u32 %s259, 1
          %s899 = scalar_lea.sflag [#allocation3], %s898
          %s900 = sand.u32 %s259, 1
          %s901 = smul.addr %s900, 16
          %s902 = scalar_lea.vmem [#allocation2], %s901
          %903 = dma.done %s899, 256
        $region68: #{tpu_custom_call.1} parent=63 // pred_fallthru
          _
      $region64: #{tpu_custom_call.1} parent=5 // pred_fallthru
        _
    $region6: #{tpu_custom_call.1} parent=1 // loop_footer
      %s22 = sadd.s32 1, %s18
    $region7: #{tpu_custom_call.1} parent=1 // loop_footer_branch
      %17 = sbr.rel target = $region3
    $region8: #{tpu_custom_call.1} parent=1 // loop_exit
      _
    %904 = vsyncpa [#allocation3], 1
    %s905 = scalar_lea.sflag [#allocation3], 1
    %906 = vsyncpa %s905, 1

</llo_original>
